<compile_context>
chip_gen: v5e
topology: v5e:2x2
jax: 0.10.0
libtpu: 0.0.40
codegen_flags: <defaults>
</compile_context>

<pallas_src>
import functools

import jax
import jax.numpy as jnp
from jax.experimental import pallas as pl
from jax.experimental.pallas import tpu as pltpu


def _round_up(a, b):
    return (a + b - 1) // b * b


def _cosine_sim_loss_kernel(logits_ref, labels_ref, out_ref, acc_ref, *,
                            alpha, n_rows, block_n, chunk, blocks_per_part,
                            reduction):
    c = pl.program_id(0)   # part axis ("parallel", split across TCs on v7x)
    i = pl.program_id(1)   # row-block axis within the part ("arbitrary")

    @pl.when(i == 0)
    def _init():
        acc_ref[...] = jnp.zeros_like(acc_ref)

    vec_dim = logits_ref.shape[-1]
    # Small (1, V) lane iota (avoids a tile-sized int32 intermediate).
    col = jax.lax.broadcasted_iota(jnp.int32, (1, vec_dim), 1)
    # (chunk, 1) sublane iota for the validity mask, hoisted out of the loop.
    row_iota = jax.lax.broadcasted_iota(jnp.int32, (chunk, 1), 0)
    # UNCLAMPED logical row offset of this tile.  The index_map clamps the DMA
    # block index to stay in bounds; rows of a duplicated / ragged block get
    # logical indices >= n_rows and are select-masked to zero below.
    base = (c * blocks_per_part + i) * block_n
    eps = jnp.float32(1e-8)
    alpha_f = jnp.float32(alpha)

    @pl.loop(0, block_n // chunk)
    def _chunk_body(s):
        start = pl.multiple_of(s * chunk, chunk)
        xc = logits_ref[pl.ds(start, chunk), :]     # native dtype (chunk, V)
        lab = labels_ref[pl.ds(start, chunk), :]    # (chunk, 1) int32

        # Fused one-hot dot: at most one nonzero per row -> exact in the
        # native dtype; only the (chunk, 1) result is converted to f32.
        onehot = col == lab                          # (chunk, V) bool
        dot = jnp.sum(jnp.where(onehot, xc, jnp.zeros((), xc.dtype)),
                      axis=-1, keepdims=True).astype(jnp.float32)

        # ||one_hot|| == 1 -> denom = max(||x||, eps) = sqrt(max(sum x^2, eps^2)).
        x32 = xc.astype(jnp.float32)
        sumsq = jnp.sum(x32 * x32, axis=-1, keepdims=True)      # (chunk, 1)
        sims = dot * jax.lax.rsqrt(jnp.maximum(sumsq, eps * eps))

        # Exact divide (per-row vector only, EUP slot) -> tight tolerances.
        loss = (1.0 - sims) / (1.0 + sims) * alpha_f             # (chunk, 1)

        # Select-mask rows past the true row count (ragged edge / dup block).
        row = base + start + row_iota
        loss = jnp.where(row < n_rows, loss, 0.0)
        acc_ref[...] += loss

    @pl.when(i == pl.num_programs(1) - 1)
    def _finalize():
        part = jnp.sum(acc_ref[...])
        if reduction == "mean":
            part = part / jnp.float32(n_rows)
        # Lane-dense (8, 128) output block; the wrapper reads element [0, 0].
        out_ref[...] = jnp.full(out_ref.shape, part, jnp.float32)


def cosine_sim_loss(logits, labels, *, alpha=5.0, reduction="mean",
                    chunk_target_bytes=1 << 20,        # per f32 temp inside loop
                    input_vmem_budget=28 << 20,        # both inputs, 2x buffered
                    vmem_limit_bytes=48 << 20):
    """Pallas equivalent of CosineSim.forward for reduction in {'mean','sum'}."""
    assert reduction in ("mean", "sum")
    vec_dim = logits.shape[-1]
    # Keep logits in their native dtype: the kernel is HBM-bandwidth-bound and
    # an f32 copy here would double HBM traffic for bf16 inputs.
    x = jnp.reshape(logits, (-1, vec_dim))                        # (N, V)
    lab = jnp.reshape(jnp.asarray(labels, jnp.int32), (-1, 1))    # (N, 1)
    n_rows = x.shape[0]
    if n_rows == 0:
        # torch.mean of an empty tensor is NaN; torch.sum is 0.
        return jnp.float32(jnp.nan) if reduction == "mean" else jnp.float32(0.0)

    itemsize = jnp.dtype(x.dtype).itemsize
    lane_v = _round_up(vec_dim, 128)                # VMEM lane padding of V

    # Inner sub-chunk: bounds each f32 temporary to ~chunk_target_bytes.
    chunk = max(8, min(chunk_target_bytes // (lane_v * 4), 1024,
                       _round_up(n_rows, 8)))
    chunk = (chunk // 8) * 8

    # Row tile sized by *VMEM* footprint (lane-padded logits row + lane-padded
    # labels row), double buffered.  No artificial row cap.
    row_vmem = lane_v * itemsize + 128 * 4
    block_n = input_vmem_budget // (2 * row_vmem)
    block_n = max(chunk, (block_n // chunk) * chunk)
    block_n = min(block_n, _round_up(n_rows, chunk))

    total_blocks = -(-n_rows // block_n)
    num_parts = 2 if total_blocks >= 2 else 1       # v7x dual-TC split
    bpp = -(-total_blocks // num_parts)             # blocks per part

    # Clamp the DMA block index into range; the kernel masks the duplicated
    # block via the unclamped logical row index, so this is purely for safety.
    def in_map(c, i):
        return (jnp.minimum(c * bpp + i, total_blocks - 1), 0)

    kernel = functools.partial(
        _cosine_sim_loss_kernel, alpha=float(alpha), n_rows=int(n_rows),
        block_n=int(block_n), chunk=int(chunk), blocks_per_part=int(bpp),
        reduction=reduction)

    cost = pl.CostEstimate(
        flops=4 * n_rows * vec_dim + 8 * n_rows,
        transcendentals=2 * n_rows,
        bytes_accessed=n_rows * (vec_dim * itemsize + 4)
        + num_parts * 8 * 128 * 4)

    out = pl.pallas_call(
        kernel,
        out_shape=jax.ShapeDtypeStruct((num_parts * 8, 128), jnp.float32),
        grid_spec=pltpu.PrefetchScalarGridSpec(
            num_scalar_prefetch=0,
            grid=(num_parts, bpp),
            in_specs=[
                pl.BlockSpec((block_n, vec_dim), in_map),
                pl.BlockSpec((block_n, 1), in_map),
            ],
            out_specs=pl.BlockSpec((8, 128), lambda c, i: (c, 0)),
            scratch_shapes=[pltpu.VMEM((chunk, 1), jnp.float32)],
        ),
        compiler_params=pltpu.CompilerParams(
            dimension_semantics=("parallel", "arbitrary"),
            vmem_limit_bytes=vmem_limit_bytes),
        cost_estimate=cost,
    )(x, lab)

    # One partial per part (whole (8,128) block filled with the same value).
    partials = out.reshape(num_parts, 8, 128)[:, 0, 0]
    return jnp.sum(partials)


def _reference(logits, labels, alpha=5.0, reduction="mean"):
    """Pure-JAX reference of the intended CosineSim forward."""
    vec_dim = logits.shape[-1]
    x = jnp.asarray(logits, jnp.float32).reshape(-1, vec_dim)
    lab = jnp.asarray(labels, jnp.int32).reshape(-1)
    onehot = jax.nn.one_hot(lab, vec_dim, dtype=jnp.float32)
    eps = 1e-8
    num = jnp.sum(x * onehot, axis=-1)
    den = jnp.maximum(
        jnp.linalg.norm(x, axis=-1) * jnp.linalg.norm(onehot, axis=-1), eps)
    sims = num / den
    loss = (1.0 - sims) / (1.0 + sims) * alpha
    if reduction == "mean":
        return jnp.mean(loss)
    if reduction == "sum":
        return jnp.sum(loss)
    return loss


if __name__ == "__main__":
    key = jax.random.PRNGKey(0)
    k1, k2, k3, k4, k5, k6 = jax.random.split(key, 6)

    # Case 1: shapes implied by the module: (batch, seq, vec_dim) + int labels.
    batch, seq, vec_dim = 2, 8, 16
    logits = jax.random.normal(k1, (batch, seq, vec_dim), dtype=jnp.float32)
    labels = jax.random.randint(k2, (batch, seq), 0, vec_dim, dtype=jnp.int32)
    out = jax.block_until_ready(
        cosine_sim_loss(logits, labels, alpha=5.0, reduction="mean"))
    ref = _reference(logits, labels, alpha=5.0, reduction="mean")
    assert jnp.allclose(out, ref, rtol=1e-4, atol=1e-4), (out, ref)

    # Case 2: ragged row count + tiny VMEM budget to exercise the multi-block,
    # two-part, clamped-duplicate-block and ragged-edge paths (reduction='sum').
    b2, s2, v2 = 3, 50, 16
    logits2 = jax.random.normal(k3, (b2, s2, v2), dtype=jnp.float32)
    labels2 = jax.random.randint(k4, (b2, s2), 0, v2, dtype=jnp.int32)
    out2 = jax.block_until_ready(
        cosine_sim_loss(logits2, labels2, alpha=2.0, reduction="sum",
                        chunk_target_bytes=4096, input_vmem_budget=64 * 1024))
    ref2 = _reference(logits2, labels2, alpha=2.0, reduction="sum")
    assert jnp.allclose(out2, ref2, rtol=1e-4, atol=1e-3), (out2, ref2)

    # Case 3: bf16 logits stay in their native dtype end-to-end.
    b3, s3, v3 = 2, 16, 256
    logits3 = jax.random.normal(k5, (b3, s3, v3), dtype=jnp.bfloat16)
    labels3 = jax.random.randint(k6, (b3, s3), 0, v3, dtype=jnp.int32)
    out3 = jax.block_until_ready(
        cosine_sim_loss(logits3, labels3, alpha=5.0, reduction="mean"))
    ref3 = _reference(logits3, labels3, alpha=5.0, reduction="mean")
    assert jnp.allclose(out3, ref3, rtol=1e-3, atol=1e-3), (out3, ref3)

    print("KERNEL_OK")
</pallas_src>

<mosaic_0001>
module attributes {stable_mosaic.version = 11 : i64} {
  func.func @_cosine_sim_loss_kernel(%arg0: i32, %arg1: i32, %arg2: memref<16x16xf32, #tpu.memory_space<vmem>>, %arg3: memref<16x1xi32, #tpu.memory_space<vmem>>, %arg4: memref<8x128xf32, #tpu.memory_space<vmem>>, %arg5: memref<16x1xf32, #tpu.memory_space<vmem>>) attributes {dimension_semantics = [#tpu.dimension_semantics<parallel>, #tpu.dimension_semantics<arbitrary>], iteration_bounds = array<i64: 1, 1>, scalar_prefetch = 0 : i64, scratch_operands = 1 : i64, tpu.core_type = #tpu.core_type<tc>, window_params = [{transform_indices = @transform_0, window_bounds = array<i64: 16, 16>}, {transform_indices = @transform_1, window_bounds = array<i64: 16, 1>}, {transform_indices = @transform_2, window_bounds = array<i64: 8, 128>}]} {
    %c0_i32 = arith.constant 0 : i32
    %0 = arith.cmpi eq, %arg1, %c0_i32 : i32
    %1 = arith.extui %0 : i1 to i32
    %c0_i32_0 = arith.constant 0 : i32
    %2 = arith.cmpi ne, %1, %c0_i32_0 : i32
    scf.if %2 {
      %cst_21 = arith.constant 0.000000e+00 : f32
      %51 = vector.broadcast %cst_21 : f32 to vector<16x1xf32>
      %c0_22 = arith.constant 0 : index
      %c0_23 = arith.constant 0 : index
      %52 = vector.load %arg5[%c0_22, %c0_23] : memref<16x1xf32, #tpu.memory_space<vmem>>, vector<16x1xf32>
      tpu.vector_store %arg5[%c0_22, %c0_23], %51 {strides = array<i32>} : memref<16x1xf32, #tpu.memory_space<vmem>>, vector<16x1xf32>,
    } else {
    }
    %3 = tpu.iota {dimensions = array<i32: 1>} : vector<1x16xi32>
    %4 = tpu.iota {dimensions = array<i32: 0>} : vector<16x1xi32>
    %c1_i32 = arith.constant 1 : i32
    %5 = arith.muli %arg0, %c1_i32 : i32
    %6 = arith.addi %5, %arg1 : i32
    %c16_i32 = arith.constant 16 : i32
    %7 = arith.muli %6, %c16_i32 : i32
    %cst = arith.constant 9.99999993E-9 : f32
    %cst_1 = arith.constant 5.000000e+00 : f32
    %c0_i32_2 = arith.constant 0 : i32
    %c1_i32_3 = arith.constant 1 : i32
    %8 = arith.muli %c0_i32_2, %c1_i32_3 : i32
    %c0_i32_4 = arith.constant 0 : i32
    %9 = arith.addi %c0_i32_4, %8 : i32
    %c16_i32_5 = arith.constant 16 : i32
    %10 = arith.muli %9, %c16_i32_5 : i32
    %11 = tpu.assume_multiple %10, 16 : i32
    %12 = arith.index_cast %11 : i32 to index
    %c0 = arith.constant 0 : index
    %13 = vector.load %arg2[%12, %c0] : memref<16x16xf32, #tpu.memory_space<vmem>>, vector<16x16xf32>
    %14 = arith.index_cast %11 : i32 to index
    %c0_6 = arith.constant 0 : index
    %15 = vector.load %arg3[%14, %c0_6] : memref<16x1xi32, #tpu.memory_space<vmem>>, vector<16x1xi32>
    %16 = vector.broadcast %3 : vector<1x16xi32> to vector<16x16xi32>
    %17 = vector.broadcast %15 : vector<16x1xi32> to vector<16x16xi32>
    %18 = arith.cmpi eq, %16, %17 : vector<16x16xi32>
    %cst_7 = arith.constant 0.000000e+00 : f32
    %19 = vector.broadcast %cst_7 : f32 to vector<16x16xf32>
    %20 = arith.select %18, %13, %19 : vector<16x16xi1>, vector<16x16xf32>
    %cst_8 = arith.constant dense<0.000000e+00> : vector<16xf32>
    %21 = vector.multi_reduction <add>, %20, %cst_8 [1] : vector<16x16xf32> to vector<16xf32>
    %22 = vector.shape_cast %21 : vector<16xf32> to vector<16x1xf32>
    %23 = arith.mulf %13, %13 : vector<16x16xf32>
    %cst_9 = arith.constant dense<0.000000e+00> : vector<16xf32>
    %24 = vector.multi_reduction <add>, %23, %cst_9 [1] : vector<16x16xf32> to vector<16xf32>
    %25 = vector.shape_cast %24 : vector<16xf32> to vector<16x1xf32>
    %26 = arith.mulf %cst, %cst : f32
    %27 = vector.broadcast %26 : f32 to vector<16x1xf32>
    %28 = arith.maximumf %25, %27 : vector<16x1xf32>
    %29 = math.rsqrt %28 : vector<16x1xf32>
    %30 = arith.mulf %22, %29 : vector<16x1xf32>
    %cst_10 = arith.constant 1.000000e+00 : f32
    %31 = vector.broadcast %cst_10 : f32 to vector<16x1xf32>
    %32 = arith.subf %31, %30 : vector<16x1xf32>
    %cst_11 = arith.constant 1.000000e+00 : f32
    %33 = vector.broadcast %cst_11 : f32 to vector<16x1xf32>
    %34 = arith.addf %33, %30 : vector<16x1xf32>
    %35 = arith.divf %32, %34 : vector<16x1xf32>
    %36 = vector.broadcast %cst_1 : f32 to vector<16x1xf32>
    %37 = arith.mulf %35, %36 : vector<16x1xf32>
    %38 = arith.addi %7, %11 : i32
    %39 = vector.broadcast %38 : i32 to vector<16x1xi32>
    %40 = arith.addi %39, %4 : vector<16x1xi32>
    %c16_i32_12 = arith.constant 16 : i32
    %41 = vector.broadcast %c16_i32_12 : i32 to vector<16x1xi32>
    %42 = arith.cmpi slt, %40, %41 : vector<16x1xi32>
    %cst_13 = arith.constant 0.000000e+00 : f32
    %43 = vector.broadcast %cst_13 : f32 to vector<16x1xf32>
    %44 = arith.select %42, %37, %43 : vector<16x1xi1>, vector<16x1xf32>
    %c0_14 = arith.constant 0 : index
    %c0_15 = arith.constant 0 : index
    %45 = vector.load %arg5[%c0_14, %c0_15] : memref<16x1xf32, #tpu.memory_space<vmem>>, vector<16x1xf32>
    %46 = arith.addf %45, %44 : vector<16x1xf32>
    %c0_16 = arith.constant 0 : index
    %c0_17 = arith.constant 0 : index
    %47 = vector.load %arg5[%c0_16, %c0_17] : memref<16x1xf32, #tpu.memory_space<vmem>>, vector<16x1xf32>
    tpu.vector_store %arg5[%c0_16, %c0_17], %46 {strides = array<i32>} : memref<16x1xf32, #tpu.memory_space<vmem>>, vector<16x1xf32>,
    %c1_i32_18 = arith.constant 1 : i32
    %c0_i32_19 = arith.constant 0 : i32
    %48 = arith.cmpi eq, %arg1, %c0_i32_19 : i32
    %49 = arith.extui %48 : i1 to i32
    %c0_i32_20 = arith.constant 0 : i32
    %50 = arith.cmpi ne, %49, %c0_i32_20 : i32
    scf.if %50 {
      %c0_21 = arith.constant 0 : index
      %c0_22 = arith.constant 0 : index
      %51 = vector.load %arg5[%c0_21, %c0_22] : memref<16x1xf32, #tpu.memory_space<vmem>>, vector<16x1xf32>
      %52 = vector.shape_cast %51 : vector<16x1xf32> to vector<1x16x1xf32>
      %cst_23 = arith.constant dense<0.000000e+00> : vector<1xf32>
      %53 = vector.multi_reduction <add>, %52, %cst_23 [1, 2] : vector<1x16x1xf32> to vector<1xf32>
      %54 = vector.shape_cast %53 : vector<1xf32> to vector<1x1x1xf32>
      %55 = vector.extract %54[0, 0, 0] : f32 from vector<1x1x1xf32>
      %cst_24 = arith.constant 1.600000e+01 : f32
      %56 = arith.divf %55, %cst_24 : f32
      %57 = vector.broadcast %56 : f32 to vector<8x128xf32>
      %c0_25 = arith.constant 0 : index
      %c0_26 = arith.constant 0 : index
      %58 = vector.load %arg4[%c0_25, %c0_26] : memref<8x128xf32, #tpu.memory_space<vmem>>, vector<8x128xf32>
      tpu.vector_store %arg4[%c0_25, %c0_26], %57 {strides = array<i32>} : memref<8x128xf32, #tpu.memory_space<vmem>>, vector<8x128xf32>,
    } else {
    }
    return
  }
  func.func @transform_0(%arg0: i32, %arg1: i32) -> (i32, i32) {
    %c1_i32 = arith.constant 1 : i32
    %0 = arith.muli %arg0, %c1_i32 : i32
    %1 = arith.addi %0, %arg1 : i32
    %c0_i32 = arith.constant 0 : i32
    %2 = arith.minsi %1, %c0_i32 : i32
    %c0_i32_0 = arith.constant 0 : i32
    %c0_i32_1 = arith.constant 0 : i32
    return %2, %c0_i32_0 : i32, i32
  }
  func.func @transform_1(%arg0: i32, %arg1: i32) -> (i32, i32) {
    %c1_i32 = arith.constant 1 : i32
    %0 = arith.muli %arg0, %c1_i32 : i32
    %1 = arith.addi %0, %arg1 : i32
    %c0_i32 = arith.constant 0 : i32
    %2 = arith.minsi %1, %c0_i32 : i32
    %c0_i32_0 = arith.constant 0 : i32
    %c0_i32_1 = arith.constant 0 : i32
    return %2, %c0_i32_0 : i32, i32
  }
  func.func @transform_2(%arg0: i32, %arg1: i32) -> (i32, i32) {
    %c0_i32 = arith.constant 0 : i32
    %c0_i32_0 = arith.constant 0 : i32
    return %arg0, %c0_i32 : i32, i32
  }
}

</mosaic_0001>

<llo_original>
// kernel: tpu_custom_call.1
$region0: #{tpu_custom_call.1}
  #allocation0 [shape = 'u32[]', space=smem, size = 0x4, offset = 0x4, fixed_abs, tag = 'smem constant byte address 0x4 - core index']
  #allocation1 [shape = 'u32[72,128]{1,0:T(1,128)}', space=vmem, size = 0x9000, scoped, tag = 'internal scratch']
  #allocation2 [shape = 'f32[16,1]{1,0:T(8,128)}', space=vmem, size = 0x2000, scoped, tag = 'scratch operand']
  %s0 = inlined_call_operand.vmem [shape: f32[16,16], index: 0, kind: input, shape index: {}]
  %s1 = inlined_call_operand.vmem [shape: s32[16,1], index: 1, kind: input, shape index: {}]
  %s2 = inlined_call_operand.hbm [shape: f32[8,128], index: 2, kind: output, shape index: {}]
  %s3 = sld [smem:[#allocation0]]
  $region26: #{tpu_custom_call.1} parent=0
    _
  %s5 = ssub.s32 1, %s3
  %s6 = scalar_select 0, %s5, %s3
  $region1: #{tpu_custom_call.1} parent=0
    #allocation3 [shape = 'u8[4096]{0}', space=vmem, size = 0x1000, scoped, tag = 'output window, operand 0, single buffered']
    #allocation4 [shape = 's32[1]{0}', space=sflag, size = 0x4, scoped, tag = 'scoped memory for tpu_custom_call.1']
    %7 = vsyncpa [#allocation4], 0
    // Predicated region
    $region2: #{tpu_custom_call.1} parent=1 // pred_check
      _
    $region3: #{tpu_custom_call.1} parent=1 // pred_check_branch
      %9 = sbr.rel (0) target = $region5
    $region4: #{tpu_custom_call.1} parent=1 // pred_region
      %s10 = sadd.s32 0, 0
      %p11 = scmp.lt.s32.totalorder %s10, 0
      %s12 = scalar_select %p11, %s10, 0
      %s13 = smul.u32 2, %s12
      %p14 = scmp.lt.s32.totalorder %s13, 1
      %s15 = scalar_select %p14, %s13, 1
      %s16 = smul.addr %s15, 8
      %s17 = scalar_lea.vmem %s0, %s16
      %s18 = sadd.s32 0, 0
      %p19 = scmp.lt.s32.totalorder %s18, 0
      %s20 = scalar_select %p19, %s18, 0
      %s21 = smul.u32 2, %s20
    $region5: #{tpu_custom_call.1} parent=1 // pred_fallthru
      _
    // Predicated region
    $region6: #{tpu_custom_call.1} parent=1 // pred_check
      _
    $region7: #{tpu_custom_call.1} parent=1 // pred_check_branch
      %23 = sbr.rel (0) target = $region9
    $region8: #{tpu_custom_call.1} parent=1 // pred_region
      %s24 = sadd.s32 0, 0
      %p25 = scmp.lt.s32.totalorder %s24, 0
      %s26 = scalar_select %p25, %s24, 0
      %s27 = smul.u32 2, %s26
      %p28 = scmp.lt.s32.totalorder %s27, 1
      %s29 = scalar_select %p28, %s27, 1
      %s30 = smul.addr %s29, 8
      %s31 = scalar_lea.vmem %s1, %s30
      %s32 = sadd.s32 0, 0
      %p33 = scmp.lt.s32.totalorder %s32, 0
      %s34 = scalar_select %p33, %s32, 0
      %s35 = smul.u32 2, %s34
    $region9: #{tpu_custom_call.1} parent=1 // pred_fallthru
      _
    %s36 = sadd.s32 0, 0
    %p37 = scmp.lt.s32.totalorder %s36, 0
    %s38 = scalar_select %p37, %s36, 0
    %s39 = smul.u32 2, %s38
    %p40 = scmp.lt.s32.totalorder %s39, 1
    %s41 = scalar_select %p40, %s39, 1
    %s42 = smul.addr %s41, 8
    %s43 = scalar_lea.vmem %s0, %s42
    %s44 = sadd.s32 0, 0
    %p45 = scmp.lt.s32.totalorder %s44, 0
    %s46 = scalar_select %p45, %s44, 0
    %s47 = smul.u32 2, %s46
    %p48 = scmp.lt.s32.totalorder %s47, 1
    %s49 = scalar_select %p48, %s47, 1
    %s50 = smul.addr %s49, 8
    %s51 = scalar_lea.vmem %s1, %s50
    %s52 = sadd.s32 0, 0
    %p53 = scmp.lt.s32.totalorder %s52, 0
    %s54 = scalar_select %p53, %s52, 0
    %s55 = smul.u32 2, %s54
    %p56 = scmp.lt.s32.totalorder %s55, 1
    %s57 = scalar_select %p56, %s55, 1
    %s58 = smul.addr %s57, 8
    %s59 = scalar_lea.vmem %s0, %s58
    %s60 = sadd.s32 0, 0
    %p61 = scmp.lt.s32.totalorder %s60, 0
    %s62 = scalar_select %p61, %s60, 0
    %s63 = smul.u32 2, %s62
    %s64 = sadd.s32 0, 0
    %p65 = scmp.lt.s32.totalorder %s64, 0
    %s66 = scalar_select %p65, %s64, 0
    %s67 = smul.u32 2, %s66
    %p68 = scmp.lt.s32.totalorder %s67, 1
    %s69 = scalar_select %p68, %s67, 1
    %s70 = smul.addr %s69, 8
    %s71 = scalar_lea.vmem %s1, %s70
    %s72 = sadd.s32 0, 0
    %p73 = scmp.lt.s32.totalorder %s72, 0
    %s74 = scalar_select %p73, %s72, 0
    %s75 = smul.u32 2, %s74
    %p76 = scmp.eq.s32.totalorder 0, 0
    // Predicated region
    $region10: #{tpu_custom_call.1} parent=1 // pred_check
      %p77 = pneg %p76
    $region11: #{tpu_custom_call.1} parent=1 // pred_check_branch
      %79 = sbr.rel (%p77) target = $region13
    $region12: #{tpu_custom_call.1} parent=1 // pred_region
      %vm80 = vcmask 7168
      %81 = vst.msk [vmem:[#allocation2] sm:$0xff] %vm80, 0.0
      %82 = vst.msk [vmem:[#allocation2 + $0x8] sm:$0xff] %vm80, 0.0
    $region13: #{tpu_custom_call.1} parent=1 // pred_fallthru
      _
    %v83 = vlaneseq
    %v84 = vand.u32 %v83, 127
    %v85 = vlaneseq
    %v86 = vshrl.u32 %v85, 7
    %v87 = vadd.s32 %v86, 8
    %s88 = sadd.s32 0, 0
    %s89 = smul.u32 %s88, 16
    %v90 = vld [vmem:[%s59] sm:$0xff]
    %v91 = vld [vmem:[%s59 + $0x8] sm:$0xff]
    %v92 = vld [vmem:[%s71] sm:$0xff]
    %v93 = vld [vmem:[%s71 + $0x8] sm:$0xff]
    %94 = vset.pattern.permute.xlu0 0
    %95 = vperm.xlu0 %94, %v92
    %v96 = vpop.permute.xlu0 %95
    %97 = vset.pattern.permute.xlu0 0
    %98 = vperm.xlu0 %97, %v93
    %v99 = vpop.permute.xlu0 %98
    %vm100 = vcmp.eq.s32.totalorder %v84, %v96
    %vm101 = vcmp.eq.s32.totalorder %v84, %v99
    %v102 = vsel %vm100, %v90, 0.0
    %v103 = vsel %vm101, %v91, 0.0
    %vm104 = vcmask 130048
    %v105 = vsel %vm104, %v102, 0.0
    %106 = vadd.xlane.f32.xlu0 %v105
    %v107 = vpop.xlane.xlu0 %106
    %v108 = vsel %vm104, %v103, 0.0
    %109 = vadd.xlane.f32.xlu0 %v108
    %v110 = vpop.xlane.xlu0 %109
    %v111 = vmul.f32 %v90, %v90
    %v112 = vmul.f32 %v91, %v91
    %v113 = vsel %vm104, %v111, 0.0
    %114 = vadd.xlane.f32.xlu0 %v113
    %v115 = vpop.xlane.xlu0 %114
    %v116 = vsel %vm104, %v112, 0.0
    %117 = vadd.xlane.f32.xlu0 %v116
    %v118 = vpop.xlane.xlu0 %117
    %v119 = vmax.f32 %v115, 1e-16
    %v120 = vmax.f32 %v118, 1e-16
    %v121 = vrsqrt.pop %v119
    %v122 = vmul.f32 %v121, %v119
    %v123 = vmul.f32 %v122, %v121
    %v124 = vmul.f32 0.5, %v123
    %v125 = vsub.f32 1.5, %v124
    %v126 = vmul.f32 %v121, %v125
    %vm127 = vweird.f32 %v119
    %vm128 = vweird.f32 %v121
    %vm129 = vmor %vm127, %vm128
    %v130 = vsel %vm129, %v121, %v126
    %v131 = vrsqrt.pop %v120
    %v132 = vmul.f32 %v131, %v120
    %v133 = vmul.f32 %v132, %v131
    %v134 = vmul.f32 0.5, %v133
    %v135 = vsub.f32 1.5, %v134
    %v136 = vmul.f32 %v131, %v135
    %vm137 = vweird.f32 %v120
    %vm138 = vweird.f32 %v131
    %vm139 = vmor %vm137, %vm138
    %v140 = vsel %vm139, %v131, %v136
    %v141 = vmul.f32 %v107, %v130
    %v142 = vmul.f32 %v110, %v140
    %v143 = vsub.f32 1.0, %v141
    %v144 = vsub.f32 1.0, %v142
    %v145 = vadd.f32 %v141, 1.0
    %v146 = vadd.f32 %v142, 1.0
    %v147 = vrcp.pop %v145
    %v148 = vmul.f32 %v145, %v147
    %v149 = vsub.f32 1.0, %v148
    %v150 = vmul.f32 %v147, %v149
    %v151 = vadd.f32 %v147, %v150
    %vm152 = vweird.f32 %v145
    %vm153 = vweird.f32 %v147
    %vm154 = vmor %vm152, %vm153
    %v155 = vsel %vm154, %v147, %v151
    %v156 = vand.u32 2147483647, %v145
    %vm157 = vcmp.eq.f32.partialorder %v156, 8.507059e+37
    %v158 = vand.u32 %v145, 2147483648
    %v159 = vor.u32 1.1754944e-38, %v158
    %v160 = vsel %vm157, %v159, %v155
    %v161 = vmul.f32 %v143, %v160
    %v162 = vrcp.pop %v146
    %v163 = vmul.f32 %v146, %v162
    %v164 = vsub.f32 1.0, %v163
    %v165 = vmul.f32 %v162, %v164
    %v166 = vadd.f32 %v162, %v165
    %vm167 = vweird.f32 %v146
    %vm168 = vweird.f32 %v162
    %vm169 = vmor %vm167, %vm168
    %v170 = vsel %vm169, %v162, %v166
    %v171 = vand.u32 2147483647, %v146
    %vm172 = vcmp.eq.f32.partialorder %v171, 8.507059e+37
    %v173 = vand.u32 %v146, 2147483648
    %v174 = vor.u32 1.1754944e-38, %v173
    %v175 = vsel %vm172, %v174, %v170
    %v176 = vmul.f32 %v144, %v175
    %v177 = vmul.f32 %v161, 5.0
    %v178 = vmul.f32 %v176, 5.0
    %s179 = sadd.s32 %s89, 0
    %v180 = vstv %s179
    %v181 = vadd.s32 %v180, %v86
    %v182 = vadd.s32 %v180, %v87
    %vm183 = vcmp.lt.s32.totalorder %v181, 16
    %vm184 = vcmp.lt.s32.totalorder %v182, 16
    %v185 = vsel %vm183, %v177, 0.0
    %v186 = vsel %vm184, %v178, 0.0
    %v187 = vld [vmem:[#allocation2] sm:$0xff]
    %v188 = vld [vmem:[#allocation2 + $0x8] sm:$0xff]
    %v189 = vadd.f32 %v187, %v185
    %v190 = vadd.f32 %v188, %v186
    %vm191 = vcmask 7168
    %192 = vst.msk [vmem:[#allocation2] sm:$0xff] %vm191, %v189
    %193 = vst.msk [vmem:[#allocation2 + $0x8] sm:$0xff] %vm191, %v190
    // Predicated region
    $region14: #{tpu_custom_call.1} parent=1 // pred_check
      %p194 = pneg %p76
    $region15: #{tpu_custom_call.1} parent=1 // pred_check_branch
      %196 = sbr.rel (%p194) target = $region17
    $region16: #{tpu_custom_call.1} parent=1 // pred_region
      %v197 = vld [vmem:[#allocation2] sm:$0xff]
      %v198 = vld [vmem:[#allocation2 + $0x8] sm:$0xff]
      %v199 = vsel %vm191, %v197, 0.0
      %v200 = vsel %vm191, %v198, 0.0
      %v201 = vadd.f32 %v199, %v200
      %202 = vadd.xlane.f32.xlu0 %v201
      %v203 = vpop.xlane.xlu0 %202
      %v204 = vrot.slane %v203, 4
      %v205 = vadd.f32 %v203, %v204
      %v206 = vrot.slane %v205, 2
      %v207 = vadd.f32 %v205, %v206
      %v208 = vrot.slane %v207, 1
      %v209 = vadd.f32 %v207, %v208
      %s210 = vtos %v209
      %v211 = vrcp.pop 16.0
      %v212 = vmul.f32 16.0, %v211
      %v213 = vsub.f32 1.0, %v212
      %v214 = vmul.f32 %v211, %v213
      %v215 = vadd.f32 %v211, %v214
      %vm216 = vweird.f32 %v211
      %v217 = vsel %vm216, %v211, %v215
      %s218 = vtos %v217
      %s219 = smul.f32 %s210, %s218
      %v220 = vstv %s219
      %221 = vst [vmem:[#allocation3] sm:$0xff] %v220
    $region17: #{tpu_custom_call.1} parent=1 // pred_fallthru
      _
    // Predicated region
    $region18: #{tpu_custom_call.1} parent=1 // pred_check
      _
    $region19: #{tpu_custom_call.1} parent=1 // pred_check_branch
      %223 = sbr.rel (0) target = $region21
    $region20: #{tpu_custom_call.1} parent=1 // pred_region
      %225 = vsyncadd [#allocation4], 0
      %s227 = sshll.u32 [#allocation3], 4
      %s228 = int_to_ptr.vmem [resolvable:$true] %s227
      %s229 = sshll.u32 %s2, 4
      %s230 = int_to_ptr.hbm [resolvable:$true] %s229
      %232 = dma.vmem_to_hbm [thread:$0]  %s228, 128, %s230, [#allocation4]
    $region21: #{tpu_custom_call.1} parent=1 // pred_fallthru
      _
    // Predicated region
    $region22: #{tpu_custom_call.1} parent=1 // pred_check
      _
    $region23: #{tpu_custom_call.1} parent=1 // pred_check_branch
      %234 = sbr.rel (0) target = $region25
    $region24: #{tpu_custom_call.1} parent=1 // pred_region
      %236 = dma.done [#allocation4], 128
    $region25: #{tpu_custom_call.1} parent=1 // pred_fallthru
      _
    %237 = vsyncpa [#allocation4], 1

</llo_original>
